<compile_context>
chip_gen: v5e
topology: v5e:2x2
jax: 0.10.0
libtpu: 0.0.40
codegen_flags: <defaults>
</compile_context>

<pallas_src>
import math

import jax
import jax.numpy as jnp
from jax import lax
from jax.experimental import pallas as pl
from jax.experimental.pallas import tpu as pltpu


# ----------------------------------------------------------------------------
# Small helpers
# ----------------------------------------------------------------------------
def _full_spec(shape):
    """Full-array-resident block (single grid step)."""
    nd = len(shape)
    return pl.BlockSpec(shape, lambda i, _nd=nd: (0,) * _nd)


def _nbytes(*arrays):
    total = 0
    for a in arrays:
        total += int(a.size) * jnp.dtype(a.dtype).itemsize
    return total


def _vmem_limit_bytes(in_bytes, out_bytes):
    # double-buffered operands + headroom; clamp well under v7x's 64 MiB/TC.
    return int(min(max(2 * (in_bytes + out_bytes) + (2 << 20), 4 << 20), 48 << 20))


# ----------------------------------------------------------------------------
# Kernel 1: fused matmul + bias  (hoisted input projections and FC head)
# ----------------------------------------------------------------------------
def _matmul_bias_kernel(x_ref, w_ref, b_ref, o_ref):
    acc = jnp.dot(x_ref[...], w_ref[...], preferred_element_type=jnp.float32)
    o_ref[...] = (acc + b_ref[...]).astype(o_ref.dtype)


def _matmul_bias(x, w, b):
    """(M, K) @ (K, N) + (1, N) -> (M, N) float32, single big MXU op."""
    M, _ = x.shape
    N = w.shape[1]
    out_bytes = M * N * 4
    return pl.pallas_call(
        _matmul_bias_kernel,
        out_shape=jax.ShapeDtypeStruct((M, N), jnp.float32),
        grid=(1,),
        in_specs=[_full_spec(x.shape), _full_spec(w.shape), _full_spec(b.shape)],
        out_specs=_full_spec((M, N)),
        compiler_params=pltpu.CompilerParams(
            dimension_semantics=("arbitrary",),
            vmem_limit_bytes=_vmem_limit_bytes(_nbytes(x, w, b), out_bytes)),
    )(x, w, b)


# ----------------------------------------------------------------------------
# Kernel 2: per-layer GRU recurrence (only h @ W_hh + gates inside the loop)
# ----------------------------------------------------------------------------
def _make_recurrence_kernel(T, B, H, unroll):
    def kernel(gi_ref, w_hh_ref, b_hn_ref, h_out_ref):
        # Weights / hidden-n bias loaded once, resident for the whole sequence.
        w_hh = w_hh_ref[...]                      # (H, 3H), gates fused r|z|n
        b_hn = b_hn_ref[...]                      # (1, H)
        cdt = w_hh.dtype

        def step(t, h):
            gi_t = gi_ref[t]                      # (B, 3H): x-proj + folded biases
            gh = jnp.dot(h.astype(cdt), w_hh,
                         preferred_element_type=jnp.float32)      # (B, 3H)
            r = jax.nn.sigmoid(gi_t[:, 0 * H:1 * H] + gh[:, 0 * H:1 * H])
            z = jax.nn.sigmoid(gi_t[:, 1 * H:2 * H] + gh[:, 1 * H:2 * H])
            n = jnp.tanh(gi_t[:, 2 * H:3 * H] + r * (gh[:, 2 * H:3 * H] + b_hn))
            h_new = (1.0 - z) * n + z * h
            h_out_ref[t] = h_new.astype(h_out_ref.dtype)
            return h_new                          # h carried in registers

        lax.fori_loop(0, T, step, jnp.zeros((B, H), jnp.float32), unroll=unroll)

    return kernel


def _gru_layer_recurrence(gi, w_hh, b_hn, T, B, H):
    unroll = True if T <= 32 else 8
    out_bytes = T * B * H * 4
    return pl.pallas_call(
        _make_recurrence_kernel(T, B, H, unroll),
        out_shape=jax.ShapeDtypeStruct((T, B, H), jnp.float32),
        grid=(1,),
        in_specs=[_full_spec(gi.shape), _full_spec(w_hh.shape),
                  _full_spec(b_hn.shape)],
        out_specs=_full_spec((T, B, H)),
        compiler_params=pltpu.CompilerParams(
            dimension_semantics=("arbitrary",),          # sequential recurrence
            vmem_limit_bytes=_vmem_limit_bytes(_nbytes(gi, w_hh, b_hn), out_bytes)),
    )(gi, w_hh, b_hn)


# ----------------------------------------------------------------------------
# Host-side parameter prep (one-time): transpose + fuse gates + fold biases
# ----------------------------------------------------------------------------
def _prepare_params(params, dtype=jnp.float32):
    layers = []
    for lp in params["layers"]:
        w_ih, w_hh = lp["w_ih"], lp["w_hh"]       # (3H, D_in), (3H, H) torch layout
        b_ih, b_hh = lp["b_ih"], lp["b_hh"]       # (3H,), (3H,)
        H = w_hh.shape[1]
        w_ih_f = jnp.transpose(w_ih).astype(dtype)          # (D_in, 3H)
        w_hh_f = jnp.transpose(w_hh).astype(dtype)          # (H, 3H)
        # r/z biases (input AND hidden side) fold into the hoisted projection;
        # only the hidden-side n bias must stay inside r * (h W_hn + b_hn).
        b_i = jnp.concatenate([b_ih[:2 * H] + b_hh[:2 * H], b_ih[2 * H:]])
        layers.append((w_ih_f, w_hh_f,
                       b_i.reshape(1, 3 * H).astype(jnp.float32),
                       b_hh[2 * H:].reshape(1, H).astype(jnp.float32)))
    w_fc = jnp.transpose(params["w_fc"]).astype(dtype)      # (H, O)
    b_fc = params["b_fc"].reshape(1, -1).astype(jnp.float32)
    return layers, w_fc, b_fc


# ----------------------------------------------------------------------------
# Forward wrapper
# ----------------------------------------------------------------------------
def tgru_forward(x, params, *, param_dtype=jnp.float32):
    """x: (B, T, D) batch_first (PyTorch convention). Returns (B, T, O)."""
    B, T, D = x.shape
    layers, w_fc, b_fc = _prepare_params(params, param_dtype)
    H = layers[0][1].shape[0]
    O = w_fc.shape[1]

    # Time-major, flattened rows (t*B + b): the hoisted projections / FC head
    # become one big matmul each and the recurrence indexes rows by timestep.
    inp = jnp.transpose(x, (1, 0, 2)).reshape(T * B, D).astype(param_dtype)

    for (w_ih, w_hh, b_i, b_hn) in layers:
        gi = _matmul_bias(inp, w_ih, b_i).reshape(T, B, 3 * H)      # all timesteps
        h_seq = _gru_layer_recurrence(gi, w_hh, b_hn, T, B, H)      # (T, B, H)
        inp = h_seq.reshape(T * B, H).astype(param_dtype)           # feeds next layer

    y = _matmul_bias(inp, w_fc, b_fc).reshape(T, B, O)              # FC over all t
    return jnp.transpose(y, (1, 0, 2))                              # (B, T, O)


# ----------------------------------------------------------------------------
# Pure-JAX reference (torch.nn.GRU semantics, f32 weights)
# ----------------------------------------------------------------------------
def tgru_reference(x, params):
    B, T, _ = x.shape
    L = len(params["layers"])
    H = params["layers"][0]["w_hh"].shape[1]
    h = [jnp.zeros((B, H), jnp.float32) for _ in range(L)]
    outs = []
    for t in range(T):
        inp = x[:, t, :]
        for l, lp in enumerate(params["layers"]):
            gi = inp @ lp["w_ih"].T + lp["b_ih"]
            gh = h[l] @ lp["w_hh"].T + lp["b_hh"]
            r = jax.nn.sigmoid(gi[:, :H] + gh[:, :H])
            z = jax.nn.sigmoid(gi[:, H:2 * H] + gh[:, H:2 * H])
            n = jnp.tanh(gi[:, 2 * H:] + r * gh[:, 2 * H:])
            h[l] = (1.0 - z) * n + z * h[l]
            inp = h[l]
        outs.append(inp @ params["w_fc"].T + params["b_fc"])
    return jnp.stack(outs, axis=1)


# ----------------------------------------------------------------------------
# Deterministic parameter construction (PyTorch layouts / init scale)
# ----------------------------------------------------------------------------
def init_params(key, input_dim, hidden_dim, layer_dim, output_dim):
    params = {"layers": []}
    k = 1.0 / math.sqrt(hidden_dim)
    for l in range(layer_dim):
        d_in = input_dim if l == 0 else hidden_dim
        key, k1, k2, k3, k4 = jax.random.split(key, 5)
        params["layers"].append({
            "w_ih": jax.random.uniform(k1, (3 * hidden_dim, d_in), jnp.float32, -k, k),
            "w_hh": jax.random.uniform(k2, (3 * hidden_dim, hidden_dim), jnp.float32, -k, k),
            "b_ih": jax.random.uniform(k3, (3 * hidden_dim,), jnp.float32, -k, k),
            "b_hh": jax.random.uniform(k4, (3 * hidden_dim,), jnp.float32, -k, k),
        })
    key, k5, k6 = jax.random.split(key, 3)
    params["w_fc"] = jax.random.uniform(k5, (output_dim, hidden_dim), jnp.float32, -k, k)
    params["b_fc"] = jax.random.uniform(k6, (output_dim,), jnp.float32, -k, k)
    return params


if __name__ == "__main__":
    # Small shapes implied by the forward: x is (batch, seq, input_dim).
    B, T = 2, 8
    input_dim, hidden_dim, layer_dim, output_dim = 8, 32, 2, 16

    key = jax.random.PRNGKey(0)
    key, kx, kp = jax.random.split(key, 3)
    x = jax.random.normal(kx, (B, T, input_dim), jnp.float32)
    params = init_params(kp, input_dim, hidden_dim, layer_dim, output_dim)

    out = jax.block_until_ready(tgru_forward(x, params))
    ref = tgru_reference(x, params)

    assert out.shape == (B, T, output_dim), out.shape
    err = jnp.max(jnp.abs(out - ref))
    assert jnp.allclose(out, ref, atol=1e-3, rtol=1e-3), f"max abs err {err}"

    # TODO(synk): for large H/L on v7x, stream W_hh via pl.ANY + make_async_copy
    # (or single-buffer weight specs) instead of full-residency to fit 64 MiB VMEM.
    print("KERNEL_OK")
</pallas_src>

<mosaic_0001>
module attributes {stable_mosaic.version = 11 : i64} {
  func.func @_matmul_bias_kernel(%arg0: i32, %arg1: memref<16x8xf32, #tpu.memory_space<vmem>>, %arg2: memref<8x96xf32, #tpu.memory_space<vmem>>, %arg3: memref<1x96xf32, #tpu.memory_space<vmem>>, %arg4: memref<16x96xf32, #tpu.memory_space<vmem>>) attributes {dimension_semantics = [#tpu.dimension_semantics<arbitrary>], iteration_bounds = array<i64: 1>, scalar_prefetch = 0 : i64, scratch_operands = 0 : i64, tpu.core_type = #tpu.core_type<tc>, window_params = [{pipeline_mode = #tpu.pipeline_mode<synchronous>, transform_indices = @transform_0, window_bounds = array<i64: 16, 8>}, {pipeline_mode = #tpu.pipeline_mode<synchronous>, transform_indices = @transform_1, window_bounds = array<i64: 8, 96>}, {pipeline_mode = #tpu.pipeline_mode<synchronous>, transform_indices = @transform_2, window_bounds = array<i64: 1, 96>}, {pipeline_mode = #tpu.pipeline_mode<synchronous>, transform_indices = @transform_3, window_bounds = array<i64: 16, 96>}]} {
    %c0 = arith.constant 0 : index
    %c0_0 = arith.constant 0 : index
    %0 = vector.load %arg1[%c0, %c0_0] : memref<16x8xf32, #tpu.memory_space<vmem>>, vector<16x8xf32>
    %c0_1 = arith.constant 0 : index
    %c0_2 = arith.constant 0 : index
    %1 = vector.load %arg2[%c0_1, %c0_2] : memref<8x96xf32, #tpu.memory_space<vmem>>, vector<8x96xf32>
    %cst = arith.constant dense<0.000000e+00> : vector<16x96xf32>
    %2 = tpu.matmul %0, %1, %cst {dimension_numbers = #tpu.dot_dimension_numbers<[1], [0], [0], [1], [0, 0, 1, 1], [], []>} : vector<16x8xf32>, vector<8x96xf32>, vector<16x96xf32> -> vector<16x96xf32>
    %c0_3 = arith.constant 0 : index
    %c0_4 = arith.constant 0 : index
    %3 = vector.load %arg3[%c0_3, %c0_4] : memref<1x96xf32, #tpu.memory_space<vmem>>, vector<1x96xf32>
    %4 = vector.broadcast %3 : vector<1x96xf32> to vector<16x96xf32>
    %5 = arith.addf %2, %4 : vector<16x96xf32>
    %c0_5 = arith.constant 0 : index
    %c0_6 = arith.constant 0 : index
    %6 = vector.load %arg4[%c0_5, %c0_6] : memref<16x96xf32, #tpu.memory_space<vmem>>, vector<16x96xf32>
    tpu.vector_store %arg4[%c0_5, %c0_6], %5 {strides = array<i32>} : memref<16x96xf32, #tpu.memory_space<vmem>>, vector<16x96xf32>,
    return
  }
  func.func @transform_0(%arg0: i32) -> (i32, i32) {
    %c0_i32 = arith.constant 0 : i32
    %c0_i32_0 = arith.constant 0 : i32
    %c0_i32_1 = arith.constant 0 : i32
    return %c0_i32, %c0_i32_0 : i32, i32
  }
  func.func @transform_1(%arg0: i32) -> (i32, i32) {
    %c0_i32 = arith.constant 0 : i32
    %c0_i32_0 = arith.constant 0 : i32
    %c0_i32_1 = arith.constant 0 : i32
    return %c0_i32, %c0_i32_0 : i32, i32
  }
  func.func @transform_2(%arg0: i32) -> (i32, i32) {
    %c0_i32 = arith.constant 0 : i32
    %c0_i32_0 = arith.constant 0 : i32
    %c0_i32_1 = arith.constant 0 : i32
    return %c0_i32, %c0_i32_0 : i32, i32
  }
  func.func @transform_3(%arg0: i32) -> (i32, i32) {
    %c0_i32 = arith.constant 0 : i32
    %c0_i32_0 = arith.constant 0 : i32
    %c0_i32_1 = arith.constant 0 : i32
    return %c0_i32, %c0_i32_0 : i32, i32
  }
}

</mosaic_0001>

<llo_original>
// kernel: tpu_custom_call.1
$region0: #{tpu_custom_call.1}
  #allocation0 [shape = 'u32[]', space=smem, size = 0x4, offset = 0x4, fixed_abs, tag = 'smem constant byte address 0x4 - core index']
  #allocation1 [shape = 'u32[72,128]{1,0:T(1,128)}', space=vmem, size = 0x9000, scoped, tag = 'internal scratch']
  %s0 = inlined_call_operand.vmem [shape: f32[16,8], index: 0, kind: input, shape index: {}]
  %s1 = inlined_call_operand.vmem [shape: f32[8,96], index: 1, kind: input, shape index: {}]
  %s2 = inlined_call_operand.vmem [shape: f32[1,96], index: 2, kind: input, shape index: {}]
  %s3 = inlined_call_operand.hbm [shape: f32[16,96], index: 3, kind: output, shape index: {}]
  %s4 = sld [smem:[#allocation0]]
  $region22: #{tpu_custom_call.1} parent=0
    _
  %s6 = ssub.s32 1, %s4
  %s7 = scalar_select 0, %s6, %s4
  $region1: #{tpu_custom_call.1} parent=0
    #allocation2 [shape = 'u8[8192]{0}', space=vmem, size = 0x2000, scoped, tag = 'output window, operand 0, single buffered']
    #allocation3 [shape = 's32[1]{0}', space=sflag, size = 0x4, scoped, tag = 'scoped memory for tpu_custom_call.1']
    %8 = vsyncpa [#allocation3], 0
    // Predicated region
    $region2: #{tpu_custom_call.1} parent=1 // pred_check
      _
    $region3: #{tpu_custom_call.1} parent=1 // pred_check_branch
      %10 = sbr.rel (0) target = $region5
    $region4: #{tpu_custom_call.1} parent=1 // pred_region
      _
    $region5: #{tpu_custom_call.1} parent=1 // pred_fallthru
      _
    // Predicated region
    $region6: #{tpu_custom_call.1} parent=1 // pred_check
      _
    $region7: #{tpu_custom_call.1} parent=1 // pred_check_branch
      %12 = sbr.rel (0) target = $region9
    $region8: #{tpu_custom_call.1} parent=1 // pred_region
      _
    $region9: #{tpu_custom_call.1} parent=1 // pred_fallthru
      _
    // Predicated region
    $region10: #{tpu_custom_call.1} parent=1 // pred_check
      _
    $region11: #{tpu_custom_call.1} parent=1 // pred_check_branch
      %14 = sbr.rel (0) target = $region13
    $region12: #{tpu_custom_call.1} parent=1 // pred_region
      _
    $region13: #{tpu_custom_call.1} parent=1 // pred_fallthru
      _
    %v15 = vld [vmem:[%s0] sm:$0xff]
    %v16 = vld [vmem:[%s0 + $0x8] sm:$0xff]
    %v17 = vld [vmem:[%s1] sm:$0xff]
    %v18 = vld [vmem:[%s2] sm:$0x1]
    %v20 = vperm.slane %v18, 0
    %vm22 = vcmask 64512
    %v24 = vsel %vm22, %v15, 0
    %v27 = vsel %vm22, %v16, 0
    %29 = vmatpush.msra.mxu0 0.0
    %30 = vmatpush.msra.mxu0 0.0
    %31 = vmatpush.msra.mxu0 0.0
    %32 = vmatpush.msra.mxu0 0.0
    %33 = vmatpush.msra.mxu0 0.0
    %34 = vmatpush.msra.mxu0 0.0
    %35 = vmatpush.msra.mxu0 0.0
    %36 = vmatpush.msra.mxu0 0.0
    %37 = vmatpush.msra.mxu0 0.0
    %38 = vmatpush.msra.mxu0 0.0
    %39 = vmatpush.msra.mxu0 0.0
    %40 = vmatpush.msra.mxu0 0.0
    %41 = vmatpush.msra.mxu0 0.0
    %42 = vmatpush.msra.mxu0 0.0
    %43 = vmatpush.msra.mxu0 0.0
    %44 = vmatpush.msra.mxu0 %v17
    %45 = vmatmul.f32.gmra.mxu0 %v24
    %v46 = vpop.f32.mrf.mxu0
    %v47 = vadd.f32 %v20, %v46
    %48 = vmatmul.f32.gmra.mxu0 %v27
    %v49 = vpop.f32.mrf.mxu0
    %v50 = vadd.f32 %v20, %v49
    %51 = vdwg.mxu0
    %vm52 = vcmask 785408
    %53 = vst.msk [vmem:[#allocation2] sm:$0xff] %vm52, %v47
    %54 = vst.msk [vmem:[#allocation2 + $0x8] sm:$0xff] %vm52, %v50
    // Predicated region
    $region14: #{tpu_custom_call.1} parent=1 // pred_check
      _
    $region15: #{tpu_custom_call.1} parent=1 // pred_check_branch
      %56 = sbr.rel (0) target = $region17
    $region16: #{tpu_custom_call.1} parent=1 // pred_region
      %58 = vsyncadd [#allocation3], 0
      %s59 = sshll.u32 [#allocation2], 4
      %s60 = int_to_ptr.vmem [resolvable:$true] %s59
      %s61 = sshll.u32 %s3, 4
      %s62 = int_to_ptr.hbm [resolvable:$true] %s61
      %67 = dma.vmem_to_hbm [thread:$0]  %s60, 256, %s62, [#allocation3], 128, 128, 8
    $region17: #{tpu_custom_call.1} parent=1 // pred_fallthru
      _
    // Predicated region
    $region18: #{tpu_custom_call.1} parent=1 // pred_check
      _
    $region19: #{tpu_custom_call.1} parent=1 // pred_check_branch
      %69 = sbr.rel (0) target = $region21
    $region20: #{tpu_custom_call.1} parent=1 // pred_region
      %71 = dma.done [#allocation3], 256
    $region21: #{tpu_custom_call.1} parent=1 // pred_fallthru
      _
    %72 = vsyncpa [#allocation3], 1

</llo_original>
